<compile_context>
chip_gen: v5e
topology: v5e:2x2
jax: 0.10.0
libtpu: 0.0.40
codegen_flags: <defaults>
</compile_context>

<pallas_src>
import jax
import jax.numpy as jnp
from jax.experimental import pallas as pl
from jax.experimental.pallas import tpu as pltpu


def _gru_stack_kernel(x_ref, h_ref, wx_ref, wh_ref, b_ref, out_ref):
    """grid=() kernel: every ref is the whole array, resident in VMEM.

    x_ref   : (B, I)          layer-0 input
    h_ref   : (L, B, H)       previous hidden state per layer
    wx_ref  : (L, 3, I, H)    input weights, gate order [r, z, n], pre-transposed
    wh_ref  : (L, 3, H, H)    hidden weights, gate order [r, z, n], pre-transposed
    b_ref   : (L, 4, H)       rows: [b_r (pre-folded), b_z (pre-folded), b_ih_n, b_hh_n]
    out_ref : (L, B, H)       new hidden state per layer
    """
    L = h_ref.shape[0]
    cdt = wx_ref.dtype                        # MXU compute dtype (f32 or bf16)

    inp = x_ref[...].astype(jnp.float32)      # chained layer input

    for l in range(L):                        # static unroll over layers
        h = h_ref[l].astype(jnp.float32)      # (B, H) this layer's previous hidden
        b = b_ref[l].astype(jnp.float32)      # (4, H) biases for this layer
        ic = inp.astype(cdt)
        hc = h.astype(cdt)

        # Each gate dot yields a full (B, H) slab -> no lane-offset slicing of a
        # (B, 3H) result (matters when H < 128).  Accumulation in f32 on the MXU.
        gr = (jnp.dot(ic, wx_ref[l, 0], preferred_element_type=jnp.float32)
              + jnp.dot(hc, wh_ref[l, 0], preferred_element_type=jnp.float32)
              + b[0:1])
        gz = (jnp.dot(ic, wx_ref[l, 1], preferred_element_type=jnp.float32)
              + jnp.dot(hc, wh_ref[l, 1], preferred_element_type=jnp.float32)
              + b[1:2])
        gxn = jnp.dot(ic, wx_ref[l, 2], preferred_element_type=jnp.float32) + b[2:3]
        ghn = jnp.dot(hc, wh_ref[l, 2], preferred_element_type=jnp.float32) + b[3:4]

        r = jax.nn.sigmoid(gr)                # EUP transcendentals (free slot vs VPU)
        z = jax.nn.sigmoid(gz)
        n = jnp.tanh(gxn + r * ghn)           # b_hh_n kept inside ghn -> scaled by r
        h_new = (1.0 - z) * n + z * h         # PyTorch GRUCell update rule

        out_val = h_new.astype(out_ref.dtype)
        out_ref[l] = out_val
        # dropout with p=0 (module default) / eval mode -> identity.
        # TODO(synk): training-mode dropout with p > 0 would need pltpu.prng_* masking here.
        inp = out_val.astype(jnp.float32)     # next layer's input == exactly what was stored


def prepare_gru_params(w_ih, w_hh, b_ih, b_hh, compute_dtype=jnp.float32):
    """Layout prep — call ONCE at init time, NOT per forward step.

    w_ih: (L, 3H, I), w_hh: (L, 3H, H), b_ih/b_hh: (L, 3H)  (PyTorch layout, gates [r,z,n]).
    Returns gate-separated, pre-transposed weights (cast to compute_dtype) and a single
    packed bias tensor (L, 4, H) kept in f32:
        row 0: b_ih_r + b_hh_r   (pre-folded)
        row 1: b_ih_z + b_hh_z   (pre-folded)
        row 2: b_ih_n
        row 3: b_hh_n            (must stay separate: scaled by r inside the kernel)
    """
    L, threeH, I = w_ih.shape
    H = threeH // 3
    wx = jnp.transpose(w_ih.reshape(L, 3, H, I), (0, 1, 3, 2))   # (L, 3, I, H)
    wh = jnp.transpose(w_hh.reshape(L, 3, H, H), (0, 1, 3, 2))   # (L, 3, H, H)
    bi = b_ih.reshape(L, 3, H)
    bh = b_hh.reshape(L, 3, H)
    b = jnp.stack([bi[:, 0] + bh[:, 0],
                   bi[:, 1] + bh[:, 1],
                   bi[:, 2],
                   bh[:, 2]], axis=1)                            # (L, 4, H)
    return wx.astype(compute_dtype), wh.astype(compute_dtype), b.astype(jnp.float32)


def multi_layer_gru_cell(x, states, params):
    """x: (B, I); states: (L, B, H); params from prepare_gru_params. Returns (L, B, H)."""
    wx, wh, b = params
    L, B, H = states.shape
    _, I = x.shape
    if L > 1:
        # The PyTorch module feeds layer i>0 the previous layer's hidden state into a
        # GRUCell built with input_size, so it only runs when input_size == hidden_size.
        assert I == H, "MultiLayerGRUCell requires input_size == hidden_size for num_layers > 1"

    vmem = pl.BlockSpec(memory_space=pltpu.MemorySpace.VMEM)     # whole array, VMEM-resident
    return pl.pallas_call(
        _gru_stack_kernel,
        out_shape=jax.ShapeDtypeStruct((L, B, H), x.dtype),
        in_specs=[vmem] * 5,
        out_specs=vmem,
    )(x, states, wx, wh, b)


def _reference(x, states, w_ih, w_hh, b_ih, b_hh):
    """Pure-JAX mirror of the PyTorch forward (eval mode / dropout p=0)."""
    L, B, H = states.shape
    inp = x
    outs = []
    for l in range(L):
        gi = inp @ w_ih[l].T + b_ih[l]
        gh = states[l] @ w_hh[l].T + b_hh[l]
        r = jax.nn.sigmoid(gi[:, 0:H] + gh[:, 0:H])
        z = jax.nn.sigmoid(gi[:, H:2 * H] + gh[:, H:2 * H])
        n = jnp.tanh(gi[:, 2 * H:] + r * gh[:, 2 * H:])
        h = (1.0 - z) * n + z * states[l]
        outs.append(h)
        inp = h
    return jnp.stack(outs, axis=0)


if __name__ == "__main__":
    # Small, module-consistent shapes: input_size == hidden_size (required for L > 1).
    num_layers = 3
    batch = 8
    input_size = hidden_size = 32

    key = jax.random.PRNGKey(0)
    kx, kh, k1, k2, k3, k4 = jax.random.split(key, 6)
    bound = 1.0 / jnp.sqrt(hidden_size)

    x = jax.random.normal(kx, (batch, input_size), dtype=jnp.float32)
    states = jax.random.normal(kh, (num_layers, batch, hidden_size), dtype=jnp.float32)

    # PyTorch GRUCell-style uniform(-1/sqrt(H), 1/sqrt(H)) parameters (PyTorch layout).
    w_ih = jax.random.uniform(k1, (num_layers, 3 * hidden_size, input_size),
                              minval=-bound, maxval=bound, dtype=jnp.float32)
    w_hh = jax.random.uniform(k2, (num_layers, 3 * hidden_size, hidden_size),
                              minval=-bound, maxval=bound, dtype=jnp.float32)
    b_ih = jax.random.uniform(k3, (num_layers, 3 * hidden_size),
                              minval=-bound, maxval=bound, dtype=jnp.float32)
    b_hh = jax.random.uniform(k4, (num_layers, 3 * hidden_size),
                              minval=-bound, maxval=bound, dtype=jnp.float32)

    ref = _reference(x, states, w_ih, w_hh, b_ih, b_hh)

    # f32 path (faithful to PyTorch defaults): strict check.
    params_f32 = prepare_gru_params(w_ih, w_hh, b_ih, b_hh)      # one-time layout prep
    out = jax.block_until_ready(multi_layer_gru_cell(x, states, params_f32))
    assert out.shape == (num_layers, batch, hidden_size)
    assert jnp.allclose(out, ref, atol=1e-5, rtol=1e-5), "mismatch vs pure-JAX reference (f32)"

    # bf16-weight MXU path (perf option on bf16-native MXUs); gate math stays f32.
    params_bf16 = prepare_gru_params(w_ih, w_hh, b_ih, b_hh, compute_dtype=jnp.bfloat16)
    out_bf16 = jax.block_until_ready(multi_layer_gru_cell(x, states, params_bf16))
    assert out_bf16.shape == (num_layers, batch, hidden_size)
    assert jnp.allclose(out_bf16, ref, atol=1e-1, rtol=1e-1), "mismatch vs reference (bf16 path)"

    print("KERNEL_OK")
</pallas_src>

<mosaic_0001>
module attributes {stable_mosaic.version = 11 : i64} {
  func.func @_gru_stack_kernel(%arg0: memref<8x32xf32, #tpu.memory_space<vmem>>, %arg1: memref<3x8x32xf32, #tpu.memory_space<vmem>>, %arg2: memref<3x3x32x32xf32, #tpu.memory_space<vmem>>, %arg3: memref<3x3x32x32xf32, #tpu.memory_space<vmem>>, %arg4: memref<3x4x32xf32, #tpu.memory_space<vmem>>, %arg5: memref<3x8x32xf32, #tpu.memory_space<vmem>>) attributes {dimension_semantics = [], scalar_prefetch = 0 : i64, scratch_operands = 0 : i64, tpu.core_type = #tpu.core_type<tc>} {
    %c0 = arith.constant 0 : index
    %c0_0 = arith.constant 0 : index
    %0 = vector.load %arg0[%c0, %c0_0] : memref<8x32xf32, #tpu.memory_space<vmem>>, vector<8x32xf32>
    %c0_1 = arith.constant 0 : index
    %c0_2 = arith.constant 0 : index
    %c0_3 = arith.constant 0 : index
    %1 = vector.load %arg1[%c0_1, %c0_2, %c0_3] : memref<3x8x32xf32, #tpu.memory_space<vmem>>, vector<1x8x32xf32>
    %2 = vector.shape_cast %1 : vector<1x8x32xf32> to vector<8x32xf32>
    %c0_4 = arith.constant 0 : index
    %c0_5 = arith.constant 0 : index
    %c0_6 = arith.constant 0 : index
    %3 = vector.load %arg4[%c0_4, %c0_5, %c0_6] : memref<3x4x32xf32, #tpu.memory_space<vmem>>, vector<1x4x32xf32>
    %4 = vector.shape_cast %3 : vector<1x4x32xf32> to vector<4x32xf32>
    %c0_7 = arith.constant 0 : index
    %c0_8 = arith.constant 0 : index
    %c0_9 = arith.constant 0 : index
    %c0_10 = arith.constant 0 : index
    %5 = vector.load %arg2[%c0_7, %c0_8, %c0_9, %c0_10] : memref<3x3x32x32xf32, #tpu.memory_space<vmem>>, vector<1x1x32x32xf32>
    %6 = vector.shape_cast %5 : vector<1x1x32x32xf32> to vector<32x32xf32>
    %cst = arith.constant dense<0.000000e+00> : vector<8x32xf32>
    %7 = tpu.matmul %0, %6, %cst {dimension_numbers = #tpu.dot_dimension_numbers<[1], [0], [0], [1], [0, 0, 1, 1], [], []>} : vector<8x32xf32>, vector<32x32xf32>, vector<8x32xf32> -> vector<8x32xf32>
    %c0_11 = arith.constant 0 : index
    %c0_12 = arith.constant 0 : index
    %c0_13 = arith.constant 0 : index
    %c0_14 = arith.constant 0 : index
    %8 = vector.load %arg3[%c0_11, %c0_12, %c0_13, %c0_14] : memref<3x3x32x32xf32, #tpu.memory_space<vmem>>, vector<1x1x32x32xf32>
    %9 = vector.shape_cast %8 : vector<1x1x32x32xf32> to vector<32x32xf32>
    %cst_15 = arith.constant dense<0.000000e+00> : vector<8x32xf32>
    %10 = tpu.matmul %2, %9, %cst_15 {dimension_numbers = #tpu.dot_dimension_numbers<[1], [0], [0], [1], [0, 0, 1, 1], [], []>} : vector<8x32xf32>, vector<32x32xf32>, vector<8x32xf32> -> vector<8x32xf32>
    %11 = arith.addf %7, %10 : vector<8x32xf32>
    %12 = vector.extract_strided_slice %4 {offsets = [0, 0], sizes = [1, 32], strides = [1, 1]} : vector<4x32xf32> to vector<1x32xf32>
    %13 = vector.broadcast %12 : vector<1x32xf32> to vector<8x32xf32>
    %14 = arith.addf %11, %13 : vector<8x32xf32>
    %c0_16 = arith.constant 0 : index
    %c1 = arith.constant 1 : index
    %c0_17 = arith.constant 0 : index
    %c0_18 = arith.constant 0 : index
    %15 = vector.load %arg2[%c0_16, %c1, %c0_17, %c0_18] : memref<3x3x32x32xf32, #tpu.memory_space<vmem>>, vector<1x1x32x32xf32>
    %16 = vector.shape_cast %15 : vector<1x1x32x32xf32> to vector<32x32xf32>
    %cst_19 = arith.constant dense<0.000000e+00> : vector<8x32xf32>
    %17 = tpu.matmul %0, %16, %cst_19 {dimension_numbers = #tpu.dot_dimension_numbers<[1], [0], [0], [1], [0, 0, 1, 1], [], []>} : vector<8x32xf32>, vector<32x32xf32>, vector<8x32xf32> -> vector<8x32xf32>
    %c0_20 = arith.constant 0 : index
    %c1_21 = arith.constant 1 : index
    %c0_22 = arith.constant 0 : index
    %c0_23 = arith.constant 0 : index
    %18 = vector.load %arg3[%c0_20, %c1_21, %c0_22, %c0_23] : memref<3x3x32x32xf32, #tpu.memory_space<vmem>>, vector<1x1x32x32xf32>
    %19 = vector.shape_cast %18 : vector<1x1x32x32xf32> to vector<32x32xf32>
    %cst_24 = arith.constant dense<0.000000e+00> : vector<8x32xf32>
    %20 = tpu.matmul %2, %19, %cst_24 {dimension_numbers = #tpu.dot_dimension_numbers<[1], [0], [0], [1], [0, 0, 1, 1], [], []>} : vector<8x32xf32>, vector<32x32xf32>, vector<8x32xf32> -> vector<8x32xf32>
    %21 = arith.addf %17, %20 : vector<8x32xf32>
    %22 = vector.extract_strided_slice %4 {offsets = [1, 0], sizes = [1, 32], strides = [1, 1]} : vector<4x32xf32> to vector<1x32xf32>
    %23 = vector.broadcast %22 : vector<1x32xf32> to vector<8x32xf32>
    %24 = arith.addf %21, %23 : vector<8x32xf32>
    %c0_25 = arith.constant 0 : index
    %c2 = arith.constant 2 : index
    %c0_26 = arith.constant 0 : index
    %c0_27 = arith.constant 0 : index
    %25 = vector.load %arg2[%c0_25, %c2, %c0_26, %c0_27] : memref<3x3x32x32xf32, #tpu.memory_space<vmem>>, vector<1x1x32x32xf32>
    %26 = vector.shape_cast %25 : vector<1x1x32x32xf32> to vector<32x32xf32>
    %cst_28 = arith.constant dense<0.000000e+00> : vector<8x32xf32>
    %27 = tpu.matmul %0, %26, %cst_28 {dimension_numbers = #tpu.dot_dimension_numbers<[1], [0], [0], [1], [0, 0, 1, 1], [], []>} : vector<8x32xf32>, vector<32x32xf32>, vector<8x32xf32> -> vector<8x32xf32>
    %28 = vector.extract_strided_slice %4 {offsets = [2, 0], sizes = [1, 32], strides = [1, 1]} : vector<4x32xf32> to vector<1x32xf32>
    %29 = vector.broadcast %28 : vector<1x32xf32> to vector<8x32xf32>
    %30 = arith.addf %27, %29 : vector<8x32xf32>
    %c0_29 = arith.constant 0 : index
    %c2_30 = arith.constant 2 : index
    %c0_31 = arith.constant 0 : index
    %c0_32 = arith.constant 0 : index
    %31 = vector.load %arg3[%c0_29, %c2_30, %c0_31, %c0_32] : memref<3x3x32x32xf32, #tpu.memory_space<vmem>>, vector<1x1x32x32xf32>
    %32 = vector.shape_cast %31 : vector<1x1x32x32xf32> to vector<32x32xf32>
    %cst_33 = arith.constant dense<0.000000e+00> : vector<8x32xf32>
    %33 = tpu.matmul %2, %32, %cst_33 {dimension_numbers = #tpu.dot_dimension_numbers<[1], [0], [0], [1], [0, 0, 1, 1], [], []>} : vector<8x32xf32>, vector<32x32xf32>, vector<8x32xf32> -> vector<8x32xf32>
    %34 = vector.extract_strided_slice %4 {offsets = [3, 0], sizes = [1, 32], strides = [1, 1]} : vector<4x32xf32> to vector<1x32xf32>
    %35 = vector.broadcast %34 : vector<1x32xf32> to vector<8x32xf32>
    %36 = arith.addf %33, %35 : vector<8x32xf32>
    %37 = arith.negf %14 : vector<8x32xf32>
    %38 = math.exp %37 : vector<8x32xf32>
    %cst_34 = arith.constant 1.000000e+00 : f32
    %39 = vector.broadcast %cst_34 : f32 to vector<8x32xf32>
    %40 = arith.addf %39, %38 : vector<8x32xf32>
    %41 = arith.divf %39, %40 : vector<8x32xf32>
    %42 = arith.negf %24 : vector<8x32xf32>
    %43 = math.exp %42 : vector<8x32xf32>
    %cst_35 = arith.constant 1.000000e+00 : f32
    %44 = vector.broadcast %cst_35 : f32 to vector<8x32xf32>
    %45 = arith.addf %44, %43 : vector<8x32xf32>
    %46 = arith.divf %44, %45 : vector<8x32xf32>
    %47 = arith.mulf %41, %36 : vector<8x32xf32>
    %48 = arith.addf %30, %47 : vector<8x32xf32>
    %49 = math.tanh %48 : vector<8x32xf32>
    %cst_36 = arith.constant 1.000000e+00 : f32
    %50 = vector.broadcast %cst_36 : f32 to vector<8x32xf32>
    %51 = arith.subf %50, %46 : vector<8x32xf32>
    %52 = arith.mulf %51, %49 : vector<8x32xf32>
    %53 = arith.mulf %46, %2 : vector<8x32xf32>
    %54 = arith.addf %52, %53 : vector<8x32xf32>
    %c0_37 = arith.constant 0 : index
    %c0_38 = arith.constant 0 : index
    %c0_39 = arith.constant 0 : index
    %55 = vector.load %arg5[%c0_37, %c0_38, %c0_39] : memref<3x8x32xf32, #tpu.memory_space<vmem>>, vector<1x8x32xf32>
    %56 = vector.shape_cast %55 : vector<1x8x32xf32> to vector<8x32xf32>
    %57 = vector.shape_cast %54 : vector<8x32xf32> to vector<1x8x32xf32>
    tpu.vector_store %arg5[%c0_37, %c0_38, %c0_39], %57 {strides = array<i32>} : memref<3x8x32xf32, #tpu.memory_space<vmem>>, vector<1x8x32xf32>,
    %c1_40 = arith.constant 1 : index
    %c0_41 = arith.constant 0 : index
    %c0_42 = arith.constant 0 : index
    %58 = vector.load %arg1[%c1_40, %c0_41, %c0_42] : memref<3x8x32xf32, #tpu.memory_space<vmem>>, vector<1x8x32xf32>
    %59 = vector.shape_cast %58 : vector<1x8x32xf32> to vector<8x32xf32>
    %c1_43 = arith.constant 1 : index
    %c0_44 = arith.constant 0 : index
    %c0_45 = arith.constant 0 : index
    %60 = vector.load %arg4[%c1_43, %c0_44, %c0_45] : memref<3x4x32xf32, #tpu.memory_space<vmem>>, vector<1x4x32xf32>
    %61 = vector.shape_cast %60 : vector<1x4x32xf32> to vector<4x32xf32>
    %c1_46 = arith.constant 1 : index
    %c0_47 = arith.constant 0 : index
    %c0_48 = arith.constant 0 : index
    %c0_49 = arith.constant 0 : index
    %62 = vector.load %arg2[%c1_46, %c0_47, %c0_48, %c0_49] : memref<3x3x32x32xf32, #tpu.memory_space<vmem>>, vector<1x1x32x32xf32>
    %63 = vector.shape_cast %62 : vector<1x1x32x32xf32> to vector<32x32xf32>
    %cst_50 = arith.constant dense<0.000000e+00> : vector<8x32xf32>
    %64 = tpu.matmul %54, %63, %cst_50 {dimension_numbers = #tpu.dot_dimension_numbers<[1], [0], [0], [1], [0, 0, 1, 1], [], []>} : vector<8x32xf32>, vector<32x32xf32>, vector<8x32xf32> -> vector<8x32xf32>
    %c1_51 = arith.constant 1 : index
    %c0_52 = arith.constant 0 : index
    %c0_53 = arith.constant 0 : index
    %c0_54 = arith.constant 0 : index
    %65 = vector.load %arg3[%c1_51, %c0_52, %c0_53, %c0_54] : memref<3x3x32x32xf32, #tpu.memory_space<vmem>>, vector<1x1x32x32xf32>
    %66 = vector.shape_cast %65 : vector<1x1x32x32xf32> to vector<32x32xf32>
    %cst_55 = arith.constant dense<0.000000e+00> : vector<8x32xf32>
    %67 = tpu.matmul %59, %66, %cst_55 {dimension_numbers = #tpu.dot_dimension_numbers<[1], [0], [0], [1], [0, 0, 1, 1], [], []>} : vector<8x32xf32>, vector<32x32xf32>, vector<8x32xf32> -> vector<8x32xf32>
    %68 = arith.addf %64, %67 : vector<8x32xf32>
    %69 = vector.extract_strided_slice %61 {offsets = [0, 0], sizes = [1, 32], strides = [1, 1]} : vector<4x32xf32> to vector<1x32xf32>
    %70 = vector.broadcast %69 : vector<1x32xf32> to vector<8x32xf32>
    %71 = arith.addf %68, %70 : vector<8x32xf32>
    %c1_56 = arith.constant 1 : index
    %c1_57 = arith.constant 1 : index
    %c0_58 = arith.constant 0 : index
    %c0_59 = arith.constant 0 : index
    %72 = vector.load %arg2[%c1_56, %c1_57, %c0_58, %c0_59] : memref<3x3x32x32xf32, #tpu.memory_space<vmem>>, vector<1x1x32x32xf32>
    %73 = vector.shape_cast %72 : vector<1x1x32x32xf32> to vector<32x32xf32>
    %cst_60 = arith.constant dense<0.000000e+00> : vector<8x32xf32>
    %74 = tpu.matmul %54, %73, %cst_60 {dimension_numbers = #tpu.dot_dimension_numbers<[1], [0], [0], [1], [0, 0, 1, 1], [], []>} : vector<8x32xf32>, vector<32x32xf32>, vector<8x32xf32> -> vector<8x32xf32>
    %c1_61 = arith.constant 1 : index
    %c1_62 = arith.constant 1 : index
    %c0_63 = arith.constant 0 : index
    %c0_64 = arith.constant 0 : index
    %75 = vector.load %arg3[%c1_61, %c1_62, %c0_63, %c0_64] : memref<3x3x32x32xf32, #tpu.memory_space<vmem>>, vector<1x1x32x32xf32>
    %76 = vector.shape_cast %75 : vector<1x1x32x32xf32> to vector<32x32xf32>
    %cst_65 = arith.constant dense<0.000000e+00> : vector<8x32xf32>
    %77 = tpu.matmul %59, %76, %cst_65 {dimension_numbers = #tpu.dot_dimension_numbers<[1], [0], [0], [1], [0, 0, 1, 1], [], []>} : vector<8x32xf32>, vector<32x32xf32>, vector<8x32xf32> -> vector<8x32xf32>
    %78 = arith.addf %74, %77 : vector<8x32xf32>
    %79 = vector.extract_strided_slice %61 {offsets = [1, 0], sizes = [1, 32], strides = [1, 1]} : vector<4x32xf32> to vector<1x32xf32>
    %80 = vector.broadcast %79 : vector<1x32xf32> to vector<8x32xf32>
    %81 = arith.addf %78, %80 : vector<8x32xf32>
    %c1_66 = arith.constant 1 : index
    %c2_67 = arith.constant 2 : index
    %c0_68 = arith.constant 0 : index
    %c0_69 = arith.constant 0 : index
    %82 = vector.load %arg2[%c1_66, %c2_67, %c0_68, %c0_69] : memref<3x3x32x32xf32, #tpu.memory_space<vmem>>, vector<1x1x32x32xf32>
    %83 = vector.shape_cast %82 : vector<1x1x32x32xf32> to vector<32x32xf32>
    %cst_70 = arith.constant dense<0.000000e+00> : vector<8x32xf32>
    %84 = tpu.matmul %54, %83, %cst_70 {dimension_numbers = #tpu.dot_dimension_numbers<[1], [0], [0], [1], [0, 0, 1, 1], [], []>} : vector<8x32xf32>, vector<32x32xf32>, vector<8x32xf32> -> vector<8x32xf32>
    %85 = vector.extract_strided_slice %61 {offsets = [2, 0], sizes = [1, 32], strides = [1, 1]} : vector<4x32xf32> to vector<1x32xf32>
    %86 = vector.broadcast %85 : vector<1x32xf32> to vector<8x32xf32>
    %87 = arith.addf %84, %86 : vector<8x32xf32>
    %c1_71 = arith.constant 1 : index
    %c2_72 = arith.constant 2 : index
    %c0_73 = arith.constant 0 : index
    %c0_74 = arith.constant 0 : index
    %88 = vector.load %arg3[%c1_71, %c2_72, %c0_73, %c0_74] : memref<3x3x32x32xf32, #tpu.memory_space<vmem>>, vector<1x1x32x32xf32>
    %89 = vector.shape_cast %88 : vector<1x1x32x32xf32> to vector<32x32xf32>
    %cst_75 = arith.constant dense<0.000000e+00> : vector<8x32xf32>
    %90 = tpu.matmul %59, %89, %cst_75 {dimension_numbers = #tpu.dot_dimension_numbers<[1], [0], [0], [1], [0, 0, 1, 1], [], []>} : vector<8x32xf32>, vector<32x32xf32>, vector<8x32xf32> -> vector<8x32xf32>
    %91 = vector.extract_strided_slice %61 {offsets = [3, 0], sizes = [1, 32], strides = [1, 1]} : vector<4x32xf32> to vector<1x32xf32>
    %92 = vector.broadcast %91 : vector<1x32xf32> to vector<8x32xf32>
    %93 = arith.addf %90, %92 : vector<8x32xf32>
    %94 = arith.negf %71 : vector<8x32xf32>
    %95 = math.exp %94 : vector<8x32xf32>
    %cst_76 = arith.constant 1.000000e+00 : f32
    %96 = vector.broadcast %cst_76 : f32 to vector<8x32xf32>
    %97 = arith.addf %96, %95 : vector<8x32xf32>
    %98 = arith.divf %96, %97 : vector<8x32xf32>
    %99 = arith.negf %81 : vector<8x32xf32>
    %100 = math.exp %99 : vector<8x32xf32>
    %cst_77 = arith.constant 1.000000e+00 : f32
    %101 = vector.broadcast %cst_77 : f32 to vector<8x32xf32>
    %102 = arith.addf %101, %100 : vector<8x32xf32>
    %103 = arith.divf %101, %102 : vector<8x32xf32>
    %104 = arith.mulf %98, %93 : vector<8x32xf32>
    %105 = arith.addf %87, %104 : vector<8x32xf32>
    %106 = math.tanh %105 : vector<8x32xf32>
    %cst_78 = arith.constant 1.000000e+00 : f32
    %107 = vector.broadcast %cst_78 : f32 to vector<8x32xf32>
    %108 = arith.subf %107, %103 : vector<8x32xf32>
    %109 = arith.mulf %108, %106 : vector<8x32xf32>
    %110 = arith.mulf %103, %59 : vector<8x32xf32>
    %111 = arith.addf %109, %110 : vector<8x32xf32>
    %c1_79 = arith.constant 1 : index
    %c0_80 = arith.constant 0 : index
    %c0_81 = arith.constant 0 : index
    %112 = vector.load %arg5[%c1_79, %c0_80, %c0_81] : memref<3x8x32xf32, #tpu.memory_space<vmem>>, vector<1x8x32xf32>
    %113 = vector.shape_cast %112 : vector<1x8x32xf32> to vector<8x32xf32>
    %114 = vector.shape_cast %111 : vector<8x32xf32> to vector<1x8x32xf32>
    tpu.vector_store %arg5[%c1_79, %c0_80, %c0_81], %114 {strides = array<i32>} : memref<3x8x32xf32, #tpu.memory_space<vmem>>, vector<1x8x32xf32>,
    %c2_82 = arith.constant 2 : index
    %c0_83 = arith.constant 0 : index
    %c0_84 = arith.constant 0 : index
    %115 = vector.load %arg1[%c2_82, %c0_83, %c0_84] : memref<3x8x32xf32, #tpu.memory_space<vmem>>, vector<1x8x32xf32>
    %116 = vector.shape_cast %115 : vector<1x8x32xf32> to vector<8x32xf32>
    %c2_85 = arith.constant 2 : index
    %c0_86 = arith.constant 0 : index
    %c0_87 = arith.constant 0 : index
    %117 = vector.load %arg4[%c2_85, %c0_86, %c0_87] : memref<3x4x32xf32, #tpu.memory_space<vmem>>, vector<1x4x32xf32>
    %118 = vector.shape_cast %117 : vector<1x4x32xf32> to vector<4x32xf32>
    %c2_88 = arith.constant 2 : index
    %c0_89 = arith.constant 0 : index
    %c0_90 = arith.constant 0 : index
    %c0_91 = arith.constant 0 : index
    %119 = vector.load %arg2[%c2_88, %c0_89, %c0_90, %c0_91] : memref<3x3x32x32xf32, #tpu.memory_space<vmem>>, vector<1x1x32x32xf32>
    %120 = vector.shape_cast %119 : vector<1x1x32x32xf32> to vector<32x32xf32>
    %cst_92 = arith.constant dense<0.000000e+00> : vector<8x32xf32>
    %121 = tpu.matmul %111, %120, %cst_92 {dimension_numbers = #tpu.dot_dimension_numbers<[1], [0], [0], [1], [0, 0, 1, 1], [], []>} : vector<8x32xf32>, vector<32x32xf32>, vector<8x32xf32> -> vector<8x32xf32>
    %c2_93 = arith.constant 2 : index
    %c0_94 = arith.constant 0 : index
    %c0_95 = arith.constant 0 : index
    %c0_96 = arith.constant 0 : index
    %122 = vector.load %arg3[%c2_93, %c0_94, %c0_95, %c0_96] : memref<3x3x32x32xf32, #tpu.memory_space<vmem>>, vector<1x1x32x32xf32>
    %123 = vector.shape_cast %122 : vector<1x1x32x32xf32> to vector<32x32xf32>
    %cst_97 = arith.constant dense<0.000000e+00> : vector<8x32xf32>
    %124 = tpu.matmul %116, %123, %cst_97 {dimension_numbers = #tpu.dot_dimension_numbers<[1], [0], [0], [1], [0, 0, 1, 1], [], []>} : vector<8x32xf32>, vector<32x32xf32>, vector<8x32xf32> -> vector<8x32xf32>
    %125 = arith.addf %121, %124 : vector<8x32xf32>
    %126 = vector.extract_strided_slice %118 {offsets = [0, 0], sizes = [1, 32], strides = [1, 1]} : vector<4x32xf32> to vector<1x32xf32>
    %127 = vector.broadcast %126 : vector<1x32xf32> to vector<8x32xf32>
    %128 = arith.addf %125, %127 : vector<8x32xf32>
    %c2_98 = arith.constant 2 : index
    %c1_99 = arith.constant 1 : index
    %c0_100 = arith.constant 0 : index
    %c0_101 = arith.constant 0 : index
    %129 = vector.load %arg2[%c2_98, %c1_99, %c0_100, %c0_101] : memref<3x3x32x32xf32, #tpu.memory_space<vmem>>, vector<1x1x32x32xf32>
    %130 = vector.shape_cast %129 : vector<1x1x32x32xf32> to vector<32x32xf32>
    %cst_102 = arith.constant dense<0.000000e+00> : vector<8x32xf32>
    %131 = tpu.matmul %111, %130, %cst_102 {dimension_numbers = #tpu.dot_dimension_numbers<[1], [0], [0], [1], [0, 0, 1, 1], [], []>} : vector<8x32xf32>, vector<32x32xf32>, vector<8x32xf32> -> vector<8x32xf32>
    %c2_103 = arith.constant 2 : index
    %c1_104 = arith.constant 1 : index
    %c0_105 = arith.constant 0 : index
    %c0_106 = arith.constant 0 : index
    %132 = vector.load %arg3[%c2_103, %c1_104, %c0_105, %c0_106] : memref<3x3x32x32xf32, #tpu.memory_space<vmem>>, vector<1x1x32x32xf32>
    %133 = vector.shape_cast %132 : vector<1x1x32x32xf32> to vector<32x32xf32>
    %cst_107 = arith.constant dense<0.000000e+00> : vector<8x32xf32>
    %134 = tpu.matmul %116, %133, %cst_107 {dimension_numbers = #tpu.dot_dimension_numbers<[1], [0], [0], [1], [0, 0, 1, 1], [], []>} : vector<8x32xf32>, vector<32x32xf32>, vector<8x32xf32> -> vector<8x32xf32>
    %135 = arith.addf %131, %134 : vector<8x32xf32>
    %136 = vector.extract_strided_slice %118 {offsets = [1, 0], sizes = [1, 32], strides = [1, 1]} : vector<4x32xf32> to vector<1x32xf32>
    %137 = vector.broadcast %136 : vector<1x32xf32> to vector<8x32xf32>
    %138 = arith.addf %135, %137 : vector<8x32xf32>
    %c2_108 = arith.constant 2 : index
    %c2_109 = arith.constant 2 : index
    %c0_110 = arith.constant 0 : index
    %c0_111 = arith.constant 0 : index
    %139 = vector.load %arg2[%c2_108, %c2_109, %c0_110, %c0_111] : memref<3x3x32x32xf32, #tpu.memory_space<vmem>>, vector<1x1x32x32xf32>
    %140 = vector.shape_cast %139 : vector<1x1x32x32xf32> to vector<32x32xf32>
    %cst_112 = arith.constant dense<0.000000e+00> : vector<8x32xf32>
    %141 = tpu.matmul %111, %140, %cst_112 {dimension_numbers = #tpu.dot_dimension_numbers<[1], [0], [0], [1], [0, 0, 1, 1], [], []>} : vector<8x32xf32>, vector<32x32xf32>, vector<8x32xf32> -> vector<8x32xf32>
    %142 = vector.extract_strided_slice %118 {offsets = [2, 0], sizes = [1, 32], strides = [1, 1]} : vector<4x32xf32> to vector<1x32xf32>
    %143 = vector.broadcast %142 : vector<1x32xf32> to vector<8x32xf32>
    %144 = arith.addf %141, %143 : vector<8x32xf32>
    %c2_113 = arith.constant 2 : index
    %c2_114 = arith.constant 2 : index
    %c0_115 = arith.constant 0 : index
    %c0_116 = arith.constant 0 : index
    %145 = vector.load %arg3[%c2_113, %c2_114, %c0_115, %c0_116] : memref<3x3x32x32xf32, #tpu.memory_space<vmem>>, vector<1x1x32x32xf32>
    %146 = vector.shape_cast %145 : vector<1x1x32x32xf32> to vector<32x32xf32>
    %cst_117 = arith.constant dense<0.000000e+00> : vector<8x32xf32>
    %147 = tpu.matmul %116, %146, %cst_117 {dimension_numbers = #tpu.dot_dimension_numbers<[1], [0], [0], [1], [0, 0, 1, 1], [], []>} : vector<8x32xf32>, vector<32x32xf32>, vector<8x32xf32> -> vector<8x32xf32>
    %148 = vector.extract_strided_slice %118 {offsets = [3, 0], sizes = [1, 32], strides = [1, 1]} : vector<4x32xf32> to vector<1x32xf32>
    %149 = vector.broadcast %148 : vector<1x32xf32> to vector<8x32xf32>
    %150 = arith.addf %147, %149 : vector<8x32xf32>
    %151 = arith.negf %128 : vector<8x32xf32>
    %152 = math.exp %151 : vector<8x32xf32>
    %cst_118 = arith.constant 1.000000e+00 : f32
    %153 = vector.broadcast %cst_118 : f32 to vector<8x32xf32>
    %154 = arith.addf %153, %152 : vector<8x32xf32>
    %155 = arith.divf %153, %154 : vector<8x32xf32>
    %156 = arith.negf %138 : vector<8x32xf32>
    %157 = math.exp %156 : vector<8x32xf32>
    %cst_119 = arith.constant 1.000000e+00 : f32
    %158 = vector.broadcast %cst_119 : f32 to vector<8x32xf32>
    %159 = arith.addf %158, %157 : vector<8x32xf32>
    %160 = arith.divf %158, %159 : vector<8x32xf32>
    %161 = arith.mulf %155, %150 : vector<8x32xf32>
    %162 = arith.addf %144, %161 : vector<8x32xf32>
    %163 = math.tanh %162 : vector<8x32xf32>
    %cst_120 = arith.constant 1.000000e+00 : f32
    %164 = vector.broadcast %cst_120 : f32 to vector<8x32xf32>
    %165 = arith.subf %164, %160 : vector<8x32xf32>
    %166 = arith.mulf %165, %163 : vector<8x32xf32>
    %167 = arith.mulf %160, %116 : vector<8x32xf32>
    %168 = arith.addf %166, %167 : vector<8x32xf32>
    %c2_121 = arith.constant 2 : index
    %c0_122 = arith.constant 0 : index
    %c0_123 = arith.constant 0 : index
    %169 = vector.load %arg5[%c2_121, %c0_122, %c0_123] : memref<3x8x32xf32, #tpu.memory_space<vmem>>, vector<1x8x32xf32>
    %170 = vector.shape_cast %169 : vector<1x8x32xf32> to vector<8x32xf32>
    %171 = vector.shape_cast %168 : vector<8x32xf32> to vector<1x8x32xf32>
    tpu.vector_store %arg5[%c2_121, %c0_122, %c0_123], %171 {strides = array<i32>} : memref<3x8x32xf32, #tpu.memory_space<vmem>>, vector<1x8x32xf32>,
    return
  }
}

</mosaic_0001>

<llo_original>
// kernel: tpu_custom_call.1
$region0: #{tpu_custom_call.1}
  #allocation0 [shape = 'u32[]', space=smem, size = 0x4, offset = 0x4, fixed_abs, tag = 'smem constant byte address 0x4 - core index']
  #allocation1 [shape = 'u32[72,128]{1,0:T(1,128)}', space=vmem, size = 0x9000, scoped, tag = 'internal scratch']
  %s0 = inlined_call_operand.hbm [shape: f32[8,32], index: 0, kind: input, shape index: {}]
  %s1 = inlined_call_operand.hbm [shape: f32[3,8,32], index: 1, kind: input, shape index: {}]
  %s2 = inlined_call_operand.hbm [shape: f32[3,3,32,32], index: 2, kind: input, shape index: {}]
  %s3 = inlined_call_operand.hbm [shape: f32[3,3,32,32], index: 3, kind: input, shape index: {}]
  %s4 = inlined_call_operand.hbm [shape: f32[3,4,32], index: 4, kind: input, shape index: {}]
  %s5 = inlined_call_operand.hbm [shape: f32[3,8,32], index: 5, kind: output, shape index: {}]
  %s6 = sld [smem:[#allocation0]]
  $region50: #{tpu_custom_call.1} parent=0
    _
  %s8 = ssub.s32 1, %s6
  %s9 = scalar_select 0, %s8, %s6
  $region1: #{tpu_custom_call.1} parent=0
    #allocation2 [shape = 'u8[4096]{0}', space=vmem, size = 0x1000, scoped, tag = 'input window, operand 0, single buffered']
    #allocation3 [shape = 's32[1]{0}', space=sflag, size = 0x4, scoped, tag = 'scoped memory for tpu_custom_call.1']
    #allocation4 [shape = 's32[1]{0}', space=sflag, size = 0x4, scoped, tag = 'scoped memory for tpu_custom_call.1']
    #allocation5 [shape = 'u8[12288]{0}', space=vmem, size = 0x3000, scoped, tag = 'input window, operand 1, single buffered']
    #allocation6 [shape = 's32[1]{0}', space=sflag, size = 0x4, scoped, tag = 'scoped memory for tpu_custom_call.1']
    #allocation7 [shape = 'u8[147456]{0}', space=vmem, size = 0x24000, scoped, tag = 'input window, operand 2, single buffered']
    #allocation8 [shape = 'u8[147456]{0}', space=vmem, size = 0x24000, scoped, tag = 'input window, operand 3, single buffered']
    #allocation9 [shape = 's32[1]{0}', space=sflag, size = 0x4, scoped, tag = 'scoped memory for tpu_custom_call.1']
    #allocation10 [shape = 'u8[6144]{0}', space=vmem, size = 0x1800, scoped, tag = 'input window, operand 4, single buffered']
    #allocation11 [shape = 'u8[12288]{0}', space=vmem, size = 0x3000, scoped, tag = 'output window, operand 0, single buffered']
    %10 = vsyncpa [#allocation3], 0
    %11 = vsyncpa [#allocation6], 0
    %12 = vsyncpa [#allocation9], 0
    %13 = vsyncpa [#allocation4], 0
    // Predicated region
    $region2: #{tpu_custom_call.1} parent=1 // pred_check
      _
    $region3: #{tpu_custom_call.1} parent=1 // pred_check_branch
      %15 = sbr.rel (0) target = $region5
    $region4: #{tpu_custom_call.1} parent=1 // pred_region
      %17 = vsyncadd [#allocation3], 0
      %s19 = sshll.u32 %s0, 4
      %s20 = int_to_ptr.hbm [resolvable:$true] %s19
      %s21 = sshll.u32 [#allocation2], 4
      %s22 = int_to_ptr.vmem [resolvable:$true] %s21
      %24 = dma.hbm_to_vmem [thread:$0]  %s20, 128, %s22, [#allocation3]
    $region5: #{tpu_custom_call.1} parent=1 // pred_fallthru
      _
    // Predicated region
    $region6: #{tpu_custom_call.1} parent=1 // pred_check
      _
    $region7: #{tpu_custom_call.1} parent=1 // pred_check_branch
      %26 = sbr.rel (0) target = $region9
    $region8: #{tpu_custom_call.1} parent=1 // pred_region
      %28 = vsyncadd [#allocation6], 0
      %s29 = sshll.u32 %s1, 4
      %s30 = int_to_ptr.hbm [resolvable:$true] %s29
      %s31 = sshll.u32 [#allocation5], 4
      %s32 = int_to_ptr.vmem [resolvable:$true] %s31
      %37 = dma.hbm_to_vmem [thread:$0]  %s30, 384, %s32, [#allocation6], 128, 128, 8
    $region9: #{tpu_custom_call.1} parent=1 // pred_fallthru
      _
    // Predicated region
    $region10: #{tpu_custom_call.1} parent=1 // pred_check
      _
    $region11: #{tpu_custom_call.1} parent=1 // pred_check_branch
      %39 = sbr.rel (0) target = $region13
    $region12: #{tpu_custom_call.1} parent=1 // pred_region
      %41 = vsyncadd [#allocation6], 0
      %s42 = sshll.u32 %s2, 4
      %s43 = int_to_ptr.hbm [resolvable:$true] %s42
      %s44 = sshll.u32 [#allocation7], 4
      %s45 = int_to_ptr.vmem [resolvable:$true] %s44
      %50 = dma.hbm_to_vmem [thread:$0]  %s43, 4608, %s45, [#allocation6], 128, 128, 8
    $region13: #{tpu_custom_call.1} parent=1 // pred_fallthru
      _
    // Predicated region
    $region14: #{tpu_custom_call.1} parent=1 // pred_check
      _
    $region15: #{tpu_custom_call.1} parent=1 // pred_check_branch
      %52 = sbr.rel (0) target = $region17
    $region16: #{tpu_custom_call.1} parent=1 // pred_region
      %54 = vsyncadd [#allocation9], 0
      %s55 = sshll.u32 %s3, 4
      %s56 = int_to_ptr.hbm [resolvable:$true] %s55
      %s57 = sshll.u32 [#allocation8], 4
      %s58 = int_to_ptr.vmem [resolvable:$true] %s57
      %63 = dma.hbm_to_vmem [thread:$0]  %s56, 4608, %s58, [#allocation9], 128, 128, 8
    $region17: #{tpu_custom_call.1} parent=1 // pred_fallthru
      _
    // Predicated region
    $region18: #{tpu_custom_call.1} parent=1 // pred_check
      _
    $region19: #{tpu_custom_call.1} parent=1 // pred_check_branch
      %65 = sbr.rel (0) target = $region21
    $region20: #{tpu_custom_call.1} parent=1 // pred_region
      %67 = vsyncadd [#allocation9], 0
      %s68 = sshll.u32 %s4, 4
      %s69 = int_to_ptr.hbm [resolvable:$true] %s68
      %s70 = sshll.u32 [#allocation10], 4
      %s71 = int_to_ptr.vmem [resolvable:$true] %s70
      %76 = dma.hbm_to_vmem [thread:$0]  %s69, 192, %s71, [#allocation9], 64, 64, 4
    $region21: #{tpu_custom_call.1} parent=1 // pred_fallthru
      _
    // Predicated region
    $region22: #{tpu_custom_call.1} parent=1 // pred_check
      _
    $region23: #{tpu_custom_call.1} parent=1 // pred_check_branch
      %78 = sbr.rel (0) target = $region25
    $region24: #{tpu_custom_call.1} parent=1 // pred_region
      %80 = dma.done [#allocation3], 128
    $region25: #{tpu_custom_call.1} parent=1 // pred_fallthru
      _
    // Predicated region
    $region26: #{tpu_custom_call.1} parent=1 // pred_check
      _
    $region27: #{tpu_custom_call.1} parent=1 // pred_check_branch
      %82 = sbr.rel (0) target = $region29
    $region28: #{tpu_custom_call.1} parent=1 // pred_region
      %84 = dma.done [#allocation6], 384
    $region29: #{tpu_custom_call.1} parent=1 // pred_fallthru
      _
    // Predicated region
    $region30: #{tpu_custom_call.1} parent=1 // pred_check
      _
    $region31: #{tpu_custom_call.1} parent=1 // pred_check_branch
      %86 = sbr.rel (0) target = $region33
    $region32: #{tpu_custom_call.1} parent=1 // pred_region
      %88 = dma.done [#allocation6], 4608
    $region33: #{tpu_custom_call.1} parent=1 // pred_fallthru
      _
    // Predicated region
    $region34: #{tpu_custom_call.1} parent=1 // pred_check
      _
    $region35: #{tpu_custom_call.1} parent=1 // pred_check_branch
      %90 = sbr.rel (0) target = $region37
    $region36: #{tpu_custom_call.1} parent=1 // pred_region
      %92 = dma.done [#allocation9], 4608
    $region37: #{tpu_custom_call.1} parent=1 // pred_fallthru
      _
    // Predicated region
    $region38: #{tpu_custom_call.1} parent=1 // pred_check
      _
    $region39: #{tpu_custom_call.1} parent=1 // pred_check_branch
      %94 = sbr.rel (0) target = $region41
    $region40: #{tpu_custom_call.1} parent=1 // pred_region
      %96 = dma.done [#allocation9], 192
    $region41: #{tpu_custom_call.1} parent=1 // pred_fallthru
      _
    %v97 = vld [vmem:[#allocation2] sm:$0xff]
    %v98 = vld [vmem:[#allocation5] sm:$0xff]
    %v99 = vld [vmem:[#allocation10] sm:$0xf]
    %v100 = vld [vmem:[#allocation7] sm:$0xff]
    %v101 = vld [vmem:[#allocation7 + $0x8] sm:$0xff]
    %v102 = vld [vmem:[#allocation7 + $0x10] sm:$0xff]
    %v103 = vld [vmem:[#allocation7 + $0x18] sm:$0xff]
    %v104 = vld [vmem:[#allocation8] sm:$0xff]
    %v105 = vld [vmem:[#allocation8 + $0x8] sm:$0xff]
    %v106 = vld [vmem:[#allocation8 + $0x10] sm:$0xff]
    %v107 = vld [vmem:[#allocation8 + $0x18] sm:$0xff]
    %vm108 = vcmask 261120
    %v110 = vsel %vm108, %v98, 0
    %112 = vmatpush.msra.mxu0 0.0
    %113 = vmatpush.msra.mxu0 0.0
    %114 = vmatpush.msra.mxu0 0.0
    %115 = vmatpush.msra.mxu0 0.0
    %116 = vmatpush.msra.mxu0 0.0
    %117 = vmatpush.msra.mxu0 0.0
    %118 = vmatpush.msra.mxu0 0.0
    %119 = vmatpush.msra.mxu0 0.0
    %120 = vmatpush.msra.mxu0 0.0
    %121 = vmatpush.msra.mxu0 0.0
    %122 = vmatpush.msra.mxu0 0.0
    %123 = vmatpush.msra.mxu0 0.0
    %124 = vmatpush.msra.mxu0 %v107
    %125 = vmatpush.msra.mxu0 %v106
    %126 = vmatpush.msra.mxu0 %v105
    %127 = vmatpush.msra.mxu0 %v104
    %128 = vmatmul.f32.gmra.mxu0 %v110
    %v129 = vpop.f32.mrf.mxu0
    %v130 = vadd.f32 0.0, %v129
    %131 = vdwg.mxu0
    %v133 = vsel %vm108, %v97, 0
    %135 = vmatpush.msra.mxu0 0.0
    %136 = vmatpush.msra.mxu0 0.0
    %137 = vmatpush.msra.mxu0 0.0
    %138 = vmatpush.msra.mxu0 0.0
    %139 = vmatpush.msra.mxu0 0.0
    %140 = vmatpush.msra.mxu0 0.0
    %141 = vmatpush.msra.mxu0 0.0
    %142 = vmatpush.msra.mxu0 0.0
    %143 = vmatpush.msra.mxu0 0.0
    %144 = vmatpush.msra.mxu0 0.0
    %145 = vmatpush.msra.mxu0 0.0
    %146 = vmatpush.msra.mxu0 0.0
    %147 = vmatpush.msra.mxu0 %v103
    %148 = vmatpush.msra.mxu0 %v102
    %149 = vmatpush.msra.mxu0 %v101
    %150 = vmatpush.msra.mxu0 %v100
    %151 = vmatmul.f32.gmra.mxu0 %v133
    %v152 = vpop.f32.mrf.mxu0
    %v153 = vadd.f32 %v130, %v152
    %154 = vdwg.mxu0
    %v155 = vperm.slane %v99, 0
    %v156 = vadd.f32 %v153, %v155
    %s157 = scalar_lea.vmem [#allocation7], 32
    %v158 = vld [vmem:[%s157] sm:$0xff]
    %v159 = vld [vmem:[%s157 + $0x8] sm:$0xff]
    %v160 = vld [vmem:[%s157 + $0x10] sm:$0xff]
    %v161 = vld [vmem:[%s157 + $0x18] sm:$0xff]
    %s162 = scalar_lea.vmem [#allocation8], 32
    %v163 = vld [vmem:[%s162] sm:$0xff]
    %v164 = vld [vmem:[%s162 + $0x8] sm:$0xff]
    %v165 = vld [vmem:[%s162 + $0x10] sm:$0xff]
    %v166 = vld [vmem:[%s162 + $0x18] sm:$0xff]
    %167 = vmatpush.msra.mxu0 0.0
    %168 = vmatpush.msra.mxu0 0.0
    %169 = vmatpush.msra.mxu0 0.0
    %170 = vmatpush.msra.mxu0 0.0
    %171 = vmatpush.msra.mxu0 0.0
    %172 = vmatpush.msra.mxu0 0.0
    %173 = vmatpush.msra.mxu0 0.0
    %174 = vmatpush.msra.mxu0 0.0
    %175 = vmatpush.msra.mxu0 0.0
    %176 = vmatpush.msra.mxu0 0.0
    %177 = vmatpush.msra.mxu0 0.0
    %178 = vmatpush.msra.mxu0 0.0
    %179 = vmatpush.msra.mxu0 %v166
    %180 = vmatpush.msra.mxu0 %v165
    %181 = vmatpush.msra.mxu0 %v164
    %182 = vmatpush.msra.mxu0 %v163
    %183 = vmatmul.f32.gmra.mxu0 %v110
    %v184 = vpop.f32.mrf.mxu0
    %v185 = vadd.f32 0.0, %v184
    %186 = vdwg.mxu0
    %187 = vmatpush.msra.mxu0 0.0
    %188 = vmatpush.msra.mxu0 0.0
    %189 = vmatpush.msra.mxu0 0.0
    %190 = vmatpush.msra.mxu0 0.0
    %191 = vmatpush.msra.mxu0 0.0
    %192 = vmatpush.msra.mxu0 0.0
    %193 = vmatpush.msra.mxu0 0.0
    %194 = vmatpush.msra.mxu0 0.0
    %195 = vmatpush.msra.mxu0 0.0
    %196 = vmatpush.msra.mxu0 0.0
    %197 = vmatpush.msra.mxu0 0.0
    %198 = vmatpush.msra.mxu0 0.0
    %199 = vmatpush.msra.mxu0 %v161
    %200 = vmatpush.msra.mxu0 %v160
    %201 = vmatpush.msra.mxu0 %v159
    %202 = vmatpush.msra.mxu0 %v158
    %203 = vmatmul.f32.gmra.mxu0 %v133
    %v204 = vpop.f32.mrf.mxu0
    %v205 = vadd.f32 %v185, %v204
    %206 = vdwg.mxu0
    %v207 = vperm.slane %v99, 1
    %v208 = vadd.f32 %v205, %v207
    %s209 = scalar_lea.vmem [#allocation7], 64
    %v210 = vld [vmem:[%s209] sm:$0xff]
    %v211 = vld [vmem:[%s209 + $0x8] sm:$0xff]
    %v212 = vld [vmem:[%s209 + $0x10] sm:$0xff]
    %v213 = vld [vmem:[%s209 + $0x18] sm:$0xff]
    %v214 = vperm.slane %v99, 2
    %215 = vmatpush.msra.mxu0 0.0
    %216 = vmatpush.msra.mxu0 0.0
    %217 = vmatpush.msra.mxu0 0.0
    %218 = vmatpush.msra.mxu0 0.0
    %219 = vmatpush.msra.mxu0 0.0
    %220 = vmatpush.msra.mxu0 0.0
    %221 = vmatpush.msra.mxu0 0.0
    %222 = vmatpush.msra.mxu0 0.0
    %223 = vmatpush.msra.mxu0 0.0
    %224 = vmatpush.msra.mxu0 0.0
    %225 = vmatpush.msra.mxu0 0.0
    %226 = vmatpush.msra.mxu0 0.0
    %227 = vmatpush.msra.mxu0 %v213
    %228 = vmatpush.msra.mxu0 %v212
    %229 = vmatpush.msra.mxu0 %v211
    %230 = vmatpush.msra.mxu0 %v210
    %231 = vmatmul.f32.gmra.mxu0 %v133
    %v232 = vpop.f32.mrf.mxu0
    %v233 = vadd.f32 %v214, %v232
    %234 = vdwg.mxu0
    %s235 = scalar_lea.vmem [#allocation8], 64
    %v236 = vld [vmem:[%s235] sm:$0xff]
    %v237 = vld [vmem:[%s235 + $0x8] sm:$0xff]
    %v238 = vld [vmem:[%s235 + $0x10] sm:$0xff]
    %v239 = vld [vmem:[%s235 + $0x18] sm:$0xff]
    %v240 = vperm.slane %v99, 3
    %241 = vmatpush.msra.mxu0 0.0
    %242 = vmatpush.msra.mxu0 0.0
    %243 = vmatpush.msra.mxu0 0.0
    %244 = vmatpush.msra.mxu0 0.0
    %245 = vmatpush.msra.mxu0 0.0
    %246 = vmatpush.msra.mxu0 0.0
    %247 = vmatpush.msra.mxu0 0.0
    %248 = vmatpush.msra.mxu0 0.0
    %249 = vmatpush.msra.mxu0 0.0
    %250 = vmatpush.msra.mxu0 0.0
    %251 = vmatpush.msra.mxu0 0.0
    %252 = vmatpush.msra.mxu0 0.0
    %253 = vmatpush.msra.mxu0 %v239
    %254 = vmatpush.msra.mxu0 %v238
    %255 = vmatpush.msra.mxu0 %v237
    %256 = vmatpush.msra.mxu0 %v236
    %257 = vmatmul.f32.gmra.mxu0 %v110
    %v258 = vpop.f32.mrf.mxu0
    %v259 = vadd.f32 %v240, %v258
    %260 = vdwg.mxu0
    %v261 = vxor.u32 %v156, 2147483648
    %v262 = vmul.f32 %v261, 1.442695
    %v263 = vpow.pop %v262
    %v264 = vadd.f32 %v263, 1.0
    %v265 = vrcp.pop %v264
    %v266 = vmul.f32 %v264, %v265
    %v267 = vsub.f32 1.0, %v266
    %v268 = vmul.f32 %v265, %v267
    %v269 = vadd.f32 %v265, %v268
    %vm270 = vweird.f32 %v264
    %vm271 = vweird.f32 %v265
    %vm272 = vmor %vm270, %vm271
    %v273 = vsel %vm272, %v265, %v269
    %v274 = vand.u32 2147483647, %v264
    %vm275 = vcmp.eq.f32.partialorder %v274, 8.507059e+37
    %v276 = vand.u32 %v264, 2147483648
    %v277 = vor.u32 1.1754944e-38, %v276
    %v278 = vsel %vm275, %v277, %v273
    %v279 = vmul.f32 1.0, %v278
    %v280 = vxor.u32 %v208, 2147483648
    %v281 = vmul.f32 %v280, 1.442695
    %v282 = vpow.pop %v281
    %v283 = vadd.f32 %v282, 1.0
    %v284 = vrcp.pop %v283
    %v285 = vmul.f32 %v283, %v284
    %v286 = vsub.f32 1.0, %v285
    %v287 = vmul.f32 %v284, %v286
    %v288 = vadd.f32 %v284, %v287
    %vm289 = vweird.f32 %v283
    %vm290 = vweird.f32 %v284
    %vm291 = vmor %vm289, %vm290
    %v292 = vsel %vm291, %v284, %v288
    %v293 = vand.u32 2147483647, %v283
    %vm294 = vcmp.eq.f32.partialorder %v293, 8.507059e+37
    %v295 = vand.u32 %v283, 2147483648
    %v296 = vor.u32 1.1754944e-38, %v295
    %v297 = vsel %vm294, %v296, %v292
    %v298 = vmul.f32 1.0, %v297
    %v299 = vmul.f32 %v279, %v259
    %v300 = vadd.f32 %v233, %v299
    %v301 = vtanh.pop %v300
    %v302 = vsub.f32 1.0, %v298
    %v303 = vmul.f32 %v302, %v301
    %v304 = vmul.f32 %v298, %v98
    %v305 = vadd.f32 %v303, %v304
    %306 = vst.msk [vmem:[#allocation11] sm:$0xff] %vm108, %v305
    %s307 = scalar_lea.vmem [#allocation5], 8
    %v308 = vld [vmem:[%s307] sm:$0xff]
    %s309 = scalar_lea.vmem [#allocation10], 4
    %v310 = vld [vmem:[%s309] sm:$0xf]
    %s311 = scalar_lea.vmem [#allocation7], 96
    %v312 = vld [vmem:[%s311] sm:$0xff]
    %v313 = vld [vmem:[%s311 + $0x8] sm:$0xff]
    %v314 = vld [vmem:[%s311 + $0x10] sm:$0xff]
    %v315 = vld [vmem:[%s311 + $0x18] sm:$0xff]
    %s316 = scalar_lea.vmem [#allocation8], 96
    %v317 = vld [vmem:[%s316] sm:$0xff]
    %v318 = vld [vmem:[%s316 + $0x8] sm:$0xff]
    %v319 = vld [vmem:[%s316 + $0x10] sm:$0xff]
    %v320 = vld [vmem:[%s316 + $0x18] sm:$0xff]
    %v322 = vsel %vm108, %v308, 0
    %324 = vmatpush.msra.mxu0 0.0
    %325 = vmatpush.msra.mxu0 0.0
    %326 = vmatpush.msra.mxu0 0.0
    %327 = vmatpush.msra.mxu0 0.0
    %328 = vmatpush.msra.mxu0 0.0
    %329 = vmatpush.msra.mxu0 0.0
    %330 = vmatpush.msra.mxu0 0.0
    %331 = vmatpush.msra.mxu0 0.0
    %332 = vmatpush.msra.mxu0 0.0
    %333 = vmatpush.msra.mxu0 0.0
    %334 = vmatpush.msra.mxu0 0.0
    %335 = vmatpush.msra.mxu0 0.0
    %336 = vmatpush.msra.mxu0 %v320
    %337 = vmatpush.msra.mxu0 %v319
    %338 = vmatpush.msra.mxu0 %v318
    %339 = vmatpush.msra.mxu0 %v317
    %340 = vmatmul.f32.gmra.mxu0 %v322
    %v341 = vpop.f32.mrf.mxu0
    %v342 = vadd.f32 0.0, %v341
    %343 = vdwg.mxu0
    %v345 = vsel %vm108, %v305, 0
    %347 = vmatpush.msra.mxu0 0.0
    %348 = vmatpush.msra.mxu0 0.0
    %349 = vmatpush.msra.mxu0 0.0
    %350 = vmatpush.msra.mxu0 0.0
    %351 = vmatpush.msra.mxu0 0.0
    %352 = vmatpush.msra.mxu0 0.0
    %353 = vmatpush.msra.mxu0 0.0
    %354 = vmatpush.msra.mxu0 0.0
    %355 = vmatpush.msra.mxu0 0.0
    %356 = vmatpush.msra.mxu0 0.0
    %357 = vmatpush.msra.mxu0 0.0
    %358 = vmatpush.msra.mxu0 0.0
    %359 = vmatpush.msra.mxu0 %v315
    %360 = vmatpush.msra.mxu0 %v314
    %361 = vmatpush.msra.mxu0 %v313
    %362 = vmatpush.msra.mxu0 %v312
    %363 = vmatmul.f32.gmra.mxu0 %v345
    %v364 = vpop.f32.mrf.mxu0
    %v365 = vadd.f32 %v342, %v364
    %366 = vdwg.mxu0
    %v367 = vperm.slane %v310, 0
    %v368 = vadd.f32 %v365, %v367
    %s369 = scalar_lea.vmem [#allocation7], 128
    %v370 = vld [vmem:[%s369] sm:$0xff]
    %v371 = vld [vmem:[%s369 + $0x8] sm:$0xff]
    %v372 = vld [vmem:[%s369 + $0x10] sm:$0xff]
    %v373 = vld [vmem:[%s369 + $0x18] sm:$0xff]
    %s374 = scalar_lea.vmem [#allocation8], 128
    %v375 = vld [vmem:[%s374] sm:$0xff]
    %v376 = vld [vmem:[%s374 + $0x8] sm:$0xff]
    %v377 = vld [vmem:[%s374 + $0x10] sm:$0xff]
    %v378 = vld [vmem:[%s374 + $0x18] sm:$0xff]
    %379 = vmatpush.msra.mxu0 0.0
    %380 = vmatpush.msra.mxu0 0.0
    %381 = vmatpush.msra.mxu0 0.0
    %382 = vmatpush.msra.mxu0 0.0
    %383 = vmatpush.msra.mxu0 0.0
    %384 = vmatpush.msra.mxu0 0.0
    %385 = vmatpush.msra.mxu0 0.0
    %386 = vmatpush.msra.mxu0 0.0
    %387 = vmatpush.msra.mxu0 0.0
    %388 = vmatpush.msra.mxu0 0.0
    %389 = vmatpush.msra.mxu0 0.0
    %390 = vmatpush.msra.mxu0 0.0
    %391 = vmatpush.msra.mxu0 %v378
    %392 = vmatpush.msra.mxu0 %v377
    %393 = vmatpush.msra.mxu0 %v376
    %394 = vmatpush.msra.mxu0 %v375
    %395 = vmatmul.f32.gmra.mxu0 %v322
    %v396 = vpop.f32.mrf.mxu0
    %v397 = vadd.f32 0.0, %v396
    %398 = vdwg.mxu0
    %399 = vmatpush.msra.mxu0 0.0
    %400 = vmatpush.msra.mxu0 0.0
    %401 = vmatpush.msra.mxu0 0.0
    %402 = vmatpush.msra.mxu0 0.0
    %403 = vmatpush.msra.mxu0 0.0
    %404 = vmatpush.msra.mxu0 0.0
    %405 = vmatpush.msra.mxu0 0.0
    %406 = vmatpush.msra.mxu0 0.0
    %407 = vmatpush.msra.mxu0 0.0
    %408 = vmatpush.msra.mxu0 0.0
    %409 = vmatpush.msra.mxu0 0.0
    %410 = vmatpush.msra.mxu0 0.0
    %411 = vmatpush.msra.mxu0 %v373
    %412 = vmatpush.msra.mxu0 %v372
    %413 = vmatpush.msra.mxu0 %v371
    %414 = vmatpush.msra.mxu0 %v370
    %415 = vmatmul.f32.gmra.mxu0 %v345
    %v416 = vpop.f32.mrf.mxu0
    %v417 = vadd.f32 %v397, %v416
    %418 = vdwg.mxu0
    %v419 = vperm.slane %v310, 1
    %v420 = vadd.f32 %v417, %v419
    %s421 = scalar_lea.vmem [#allocation7], 160
    %v422 = vld [vmem:[%s421] sm:$0xff]
    %v423 = vld [vmem:[%s421 + $0x8] sm:$0xff]
    %v424 = vld [vmem:[%s421 + $0x10] sm:$0xff]
    %v425 = vld [vmem:[%s421 + $0x18] sm:$0xff]
    %v426 = vperm.slane %v310, 2
    %427 = vmatpush.msra.mxu0 0.0
    %428 = vmatpush.msra.mxu0 0.0
    %429 = vmatpush.msra.mxu0 0.0
    %430 = vmatpush.msra.mxu0 0.0
    %431 = vmatpush.msra.mxu0 0.0
    %432 = vmatpush.msra.mxu0 0.0
    %433 = vmatpush.msra.mxu0 0.0
    %434 = vmatpush.msra.mxu0 0.0
    %435 = vmatpush.msra.mxu0 0.0
    %436 = vmatpush.msra.mxu0 0.0
    %437 = vmatpush.msra.mxu0 0.0
    %438 = vmatpush.msra.mxu0 0.0
    %439 = vmatpush.msra.mxu0 %v425
    %440 = vmatpush.msra.mxu0 %v424
    %441 = vmatpush.msra.mxu0 %v423
    %442 = vmatpush.msra.mxu0 %v422
    %443 = vmatmul.f32.gmra.mxu0 %v345
    %v444 = vpop.f32.mrf.mxu0
    %v445 = vadd.f32 %v426, %v444
    %446 = vdwg.mxu0
    %s447 = scalar_lea.vmem [#allocation8], 160
    %v448 = vld [vmem:[%s447] sm:$0xff]
    %v449 = vld [vmem:[%s447 + $0x8] sm:$0xff]
    %v450 = vld [vmem:[%s447 + $0x10] sm:$0xff]
    %v451 = vld [vmem:[%s447 + $0x18] sm:$0xff]
    %v452 = vperm.slane %v310, 3
    %453 = vmatpush.msra.mxu0 0.0
    %454 = vmatpush.msra.mxu0 0.0
    %455 = vmatpush.msra.mxu0 0.0
    %456 = vmatpush.msra.mxu0 0.0
    %457 = vmatpush.msra.mxu0 0.0
    %458 = vmatpush.msra.mxu0 0.0
    %459 = vmatpush.msra.mxu0 0.0
    %460 = vmatpush.msra.mxu0 0.0
    %461 = vmatpush.msra.mxu0 0.0
    %462 = vmatpush.msra.mxu0 0.0
    %463 = vmatpush.msra.mxu0 0.0
    %464 = vmatpush.msra.mxu0 0.0
    %465 = vmatpush.msra.mxu0 %v451
    %466 = vmatpush.msra.mxu0 %v450
    %467 = vmatpush.msra.mxu0 %v449
    %468 = vmatpush.msra.mxu0 %v448
    %469 = vmatmul.f32.gmra.mxu0 %v322
    %v470 = vpop.f32.mrf.mxu0
    %v471 = vadd.f32 %v452, %v470
    %472 = vdwg.mxu0
    %v473 = vxor.u32 %v368, 2147483648
    %v474 = vmul.f32 %v473, 1.442695
    %v475 = vpow.pop %v474
    %v476 = vadd.f32 %v475, 1.0
    %v477 = vrcp.pop %v476
    %v478 = vmul.f32 %v476, %v477
    %v479 = vsub.f32 1.0, %v478
    %v480 = vmul.f32 %v477, %v479
    %v481 = vadd.f32 %v477, %v480
    %vm482 = vweird.f32 %v476
    %vm483 = vweird.f32 %v477
    %vm484 = vmor %vm482, %vm483
    %v485 = vsel %vm484, %v477, %v481
    %v486 = vand.u32 2147483647, %v476
    %vm487 = vcmp.eq.f32.partialorder %v486, 8.507059e+37
    %v488 = vand.u32 %v476, 2147483648
    %v489 = vor.u32 1.1754944e-38, %v488
    %v490 = vsel %vm487, %v489, %v485
    %v491 = vmul.f32 1.0, %v490
    %v492 = vxor.u32 %v420, 2147483648
    %v493 = vmul.f32 %v492, 1.442695
    %v494 = vpow.pop %v493
    %v495 = vadd.f32 %v494, 1.0
    %v496 = vrcp.pop %v495
    %v497 = vmul.f32 %v495, %v496
    %v498 = vsub.f32 1.0, %v497
    %v499 = vmul.f32 %v496, %v498
    %v500 = vadd.f32 %v496, %v499
    %vm501 = vweird.f32 %v495
    %vm502 = vweird.f32 %v496
    %vm503 = vmor %vm501, %vm502
    %v504 = vsel %vm503, %v496, %v500
    %v505 = vand.u32 2147483647, %v495
    %vm506 = vcmp.eq.f32.partialorder %v505, 8.507059e+37
    %v507 = vand.u32 %v495, 2147483648
    %v508 = vor.u32 1.1754944e-38, %v507
    %v509 = vsel %vm506, %v508, %v504
    %v510 = vmul.f32 1.0, %v509
    %v511 = vmul.f32 %v491, %v471
    %v512 = vadd.f32 %v445, %v511
    %v513 = vtanh.pop %v512
    %v514 = vsub.f32 1.0, %v510
    %v515 = vmul.f32 %v514, %v513
    %v516 = vmul.f32 %v510, %v308
    %v517 = vadd.f32 %v515, %v516
    %s518 = scalar_lea.vmem [#allocation11], 8
    %519 = vst.msk [vmem:[%s518] sm:$0xff] %vm108, %v517
    %s520 = scalar_lea.vmem [#allocation5], 16
    %v521 = vld [vmem:[%s520] sm:$0xff]
    %s522 = scalar_lea.vmem [#allocation10], 8
    %v523 = vld [vmem:[%s522] sm:$0xf]
    %s524 = scalar_lea.vmem [#allocation7], 192
    %v525 = vld [vmem:[%s524] sm:$0xff]
    %v526 = vld [vmem:[%s524 + $0x8] sm:$0xff]
    %v527 = vld [vmem:[%s524 + $0x10] sm:$0xff]
    %v528 = vld [vmem:[%s524 + $0x18] sm:$0xff]
    %s529 = scalar_lea.vmem [#allocation8], 192
    %v530 = vld [vmem:[%s529] sm:$0xff]
    %v531 = vld [vmem:[%s529 + $0x8] sm:$0xff]
    %v532 = vld [vmem:[%s529 + $0x10] sm:$0xff]
    %v533 = vld [vmem:[%s529 + $0x18] sm:$0xff]
    %v535 = vsel %vm108, %v521, 0
    %537 = vmatpush.msra.mxu0 0.0
    %538 = vmatpush.msra.mxu0 0.0
    %539 = vmatpush.msra.mxu0 0.0
    %540 = vmatpush.msra.mxu0 0.0
    %541 = vmatpush.msra.mxu0 0.0
    %542 = vmatpush.msra.mxu0 0.0
    %543 = vmatpush.msra.mxu0 0.0
    %544 = vmatpush.msra.mxu0 0.0
    %545 = vmatpush.msra.mxu0 0.0
    %546 = vmatpush.msra.mxu0 0.0
    %547 = vmatpush.msra.mxu0 0.0
    %548 = vmatpush.msra.mxu0 0.0
    %549 = vmatpush.msra.mxu0 %v533
    %550 = vmatpush.msra.mxu0 %v532
    %551 = vmatpush.msra.mxu0 %v531
    %552 = vmatpush.msra.mxu0 %v530
    %553 = vmatmul.f32.gmra.mxu0 %v535
    %v554 = vpop.f32.mrf.mxu0
    %v555 = vadd.f32 0.0, %v554
    %556 = vdwg.mxu0
    %v558 = vsel %vm108, %v517, 0
    %560 = vmatpush.msra.mxu0 0.0
    %561 = vmatpush.msra.mxu0 0.0
    %562 = vmatpush.msra.mxu0 0.0
    %563 = vmatpush.msra.mxu0 0.0
    %564 = vmatpush.msra.mxu0 0.0
    %565 = vmatpush.msra.mxu0 0.0
    %566 = vmatpush.msra.mxu0 0.0
    %567 = vmatpush.msra.mxu0 0.0
    %568 = vmatpush.msra.mxu0 0.0
    %569 = vmatpush.msra.mxu0 0.0
    %570 = vmatpush.msra.mxu0 0.0
    %571 = vmatpush.msra.mxu0 0.0
    %572 = vmatpush.msra.mxu0 %v528
    %573 = vmatpush.msra.mxu0 %v527
    %574 = vmatpush.msra.mxu0 %v526
    %575 = vmatpush.msra.mxu0 %v525
    %576 = vmatmul.f32.gmra.mxu0 %v558
    %v577 = vpop.f32.mrf.mxu0
    %v578 = vadd.f32 %v555, %v577
    %579 = vdwg.mxu0
    %v580 = vperm.slane %v523, 0
    %v581 = vadd.f32 %v578, %v580
    %s582 = scalar_lea.vmem [#allocation7], 224
    %v583 = vld [vmem:[%s582] sm:$0xff]
    %v584 = vld [vmem:[%s582 + $0x8] sm:$0xff]
    %v585 = vld [vmem:[%s582 + $0x10] sm:$0xff]
    %v586 = vld [vmem:[%s582 + $0x18] sm:$0xff]
    %s587 = scalar_lea.vmem [#allocation8], 224
    %v588 = vld [vmem:[%s587] sm:$0xff]
    %v589 = vld [vmem:[%s587 + $0x8] sm:$0xff]
    %v590 = vld [vmem:[%s587 + $0x10] sm:$0xff]
    %v591 = vld [vmem:[%s587 + $0x18] sm:$0xff]
    %592 = vmatpush.msra.mxu0 0.0
    %593 = vmatpush.msra.mxu0 0.0
    %594 = vmatpush.msra.mxu0 0.0
    %595 = vmatpush.msra.mxu0 0.0
    %596 = vmatpush.msra.mxu0 0.0
    %597 = vmatpush.msra.mxu0 0.0
    %598 = vmatpush.msra.mxu0 0.0
    %599 = vmatpush.msra.mxu0 0.0
    %600 = vmatpush.msra.mxu0 0.0
    %601 = vmatpush.msra.mxu0 0.0
    %602 = vmatpush.msra.mxu0 0.0
    %603 = vmatpush.msra.mxu0 0.0
    %604 = vmatpush.msra.mxu0 %v591
    %605 = vmatpush.msra.mxu0 %v590
    %606 = vmatpush.msra.mxu0 %v589
    %607 = vmatpush.msra.mxu0 %v588
    %608 = vmatmul.f32.gmra.mxu0 %v535
    %v609 = vpop.f32.mrf.mxu0
    %v610 = vadd.f32 0.0, %v609
    %611 = vdwg.mxu0
    %612 = vmatpush.msra.mxu0 0.0
    %613 = vmatpush.msra.mxu0 0.0
    %614 = vmatpush.msra.mxu0 0.0
    %615 = vmatpush.msra.mxu0 0.0
    %616 = vmatpush.msra.mxu0 0.0
    %617 = vmatpush.msra.mxu0 0.0
    %618 = vmatpush.msra.mxu0 0.0
    %619 = vmatpush.msra.mxu0 0.0
    %620 = vmatpush.msra.mxu0 0.0
    %621 = vmatpush.msra.mxu0 0.0
    %622 = vmatpush.msra.mxu0 0.0
    %623 = vmatpush.msra.mxu0 0.0
    %624 = vmatpush.msra.mxu0 %v586
    %625 = vmatpush.msra.mxu0 %v585
    %626 = vmatpush.msra.mxu0 %v584
    %627 = vmatpush.msra.mxu0 %v583
    %628 = vmatmul.f32.gmra.mxu0 %v558
    %v629 = vpop.f32.mrf.mxu0
    %v630 = vadd.f32 %v610, %v629
    %631 = vdwg.mxu0
    %v632 = vperm.slane %v523, 1
    %v633 = vadd.f32 %v630, %v632
    %s634 = scalar_lea.vmem [#allocation7], 256
    %v635 = vld [vmem:[%s634] sm:$0xff]
    %v636 = vld [vmem:[%s634 + $0x8] sm:$0xff]
    %v637 = vld [vmem:[%s634 + $0x10] sm:$0xff]
    %v638 = vld [vmem:[%s634 + $0x18] sm:$0xff]
    %v639 = vperm.slane %v523, 2
    %640 = vmatpush.msra.mxu0 0.0
    %641 = vmatpush.msra.mxu0 0.0
    %642 = vmatpush.msra.mxu0 0.0
    %643 = vmatpush.msra.mxu0 0.0
    %644 = vmatpush.msra.mxu0 0.0
    %645 = vmatpush.msra.mxu0 0.0
    %646 = vmatpush.msra.mxu0 0.0
    %647 = vmatpush.msra.mxu0 0.0
    %648 = vmatpush.msra.mxu0 0.0
    %649 = vmatpush.msra.mxu0 0.0
    %650 = vmatpush.msra.mxu0 0.0
    %651 = vmatpush.msra.mxu0 0.0
    %652 = vmatpush.msra.mxu0 %v638
    %653 = vmatpush.msra.mxu0 %v637
    %654 = vmatpush.msra.mxu0 %v636
    %655 = vmatpush.msra.mxu0 %v635
    %656 = vmatmul.f32.gmra.mxu0 %v558
    %v657 = vpop.f32.mrf.mxu0
    %v658 = vadd.f32 %v639, %v657
    %659 = vdwg.mxu0
    %s660 = scalar_lea.vmem [#allocation8], 256
    %v661 = vld [vmem:[%s660] sm:$0xff]
    %v662 = vld [vmem:[%s660 + $0x8] sm:$0xff]
    %v663 = vld [vmem:[%s660 + $0x10] sm:$0xff]
    %v664 = vld [vmem:[%s660 + $0x18] sm:$0xff]
    %v665 = vperm.slane %v523, 3
    %666 = vmatpush.msra.mxu0 0.0
    %667 = vmatpush.msra.mxu0 0.0
    %668 = vmatpush.msra.mxu0 0.0
    %669 = vmatpush.msra.mxu0 0.0
    %670 = vmatpush.msra.mxu0 0.0
    %671 = vmatpush.msra.mxu0 0.0
    %672 = vmatpush.msra.mxu0 0.0
    %673 = vmatpush.msra.mxu0 0.0
    %674 = vmatpush.msra.mxu0 0.0
    %675 = vmatpush.msra.mxu0 0.0
    %676 = vmatpush.msra.mxu0 0.0
    %677 = vmatpush.msra.mxu0 0.0
    %678 = vmatpush.msra.mxu0 %v664
    %679 = vmatpush.msra.mxu0 %v663
    %680 = vmatpush.msra.mxu0 %v662
    %681 = vmatpush.msra.mxu0 %v661
    %682 = vmatmul.f32.gmra.mxu0 %v535
    %v683 = vpop.f32.mrf.mxu0
    %v684 = vadd.f32 %v665, %v683
    %685 = vdwg.mxu0
    %v686 = vxor.u32 %v581, 2147483648
    %v687 = vmul.f32 %v686, 1.442695
    %v688 = vpow.pop %v687
    %v689 = vadd.f32 %v688, 1.0
    %v690 = vrcp.pop %v689
    %v691 = vmul.f32 %v689, %v690
    %v692 = vsub.f32 1.0, %v691
    %v693 = vmul.f32 %v690, %v692
    %v694 = vadd.f32 %v690, %v693
    %vm695 = vweird.f32 %v689
    %vm696 = vweird.f32 %v690
    %vm697 = vmor %vm695, %vm696
    %v698 = vsel %vm697, %v690, %v694
    %v699 = vand.u32 2147483647, %v689
    %vm700 = vcmp.eq.f32.partialorder %v699, 8.507059e+37
    %v701 = vand.u32 %v689, 2147483648
    %v702 = vor.u32 1.1754944e-38, %v701
    %v703 = vsel %vm700, %v702, %v698
    %v704 = vmul.f32 1.0, %v703
    %v705 = vxor.u32 %v633, 2147483648
    %v706 = vmul.f32 %v705, 1.442695
    %v707 = vpow.pop %v706
    %v708 = vadd.f32 %v707, 1.0
    %v709 = vrcp.pop %v708
    %v710 = vmul.f32 %v708, %v709
    %v711 = vsub.f32 1.0, %v710
    %v712 = vmul.f32 %v709, %v711
    %v713 = vadd.f32 %v709, %v712
    %vm714 = vweird.f32 %v708
    %vm715 = vweird.f32 %v709
    %vm716 = vmor %vm714, %vm715
    %v717 = vsel %vm716, %v709, %v713
    %v718 = vand.u32 2147483647, %v708
    %vm719 = vcmp.eq.f32.partialorder %v718, 8.507059e+37
    %v720 = vand.u32 %v708, 2147483648
    %v721 = vor.u32 1.1754944e-38, %v720
    %v722 = vsel %vm719, %v721, %v717
    %v723 = vmul.f32 1.0, %v722
    %v724 = vmul.f32 %v704, %v684
    %v725 = vadd.f32 %v658, %v724
    %v726 = vtanh.pop %v725
    %v727 = vsub.f32 1.0, %v723
    %v728 = vmul.f32 %v727, %v726
    %v729 = vmul.f32 %v723, %v521
    %v730 = vadd.f32 %v728, %v729
    %s731 = scalar_lea.vmem [#allocation11], 16
    %732 = vst.msk [vmem:[%s731] sm:$0xff] %vm108, %v730
    // Predicated region
    $region42: #{tpu_custom_call.1} parent=1 // pred_check
      _
    $region43: #{tpu_custom_call.1} parent=1 // pred_check_branch
      %734 = sbr.rel (0) target = $region45
    $region44: #{tpu_custom_call.1} parent=1 // pred_region
      %736 = vsyncadd [#allocation4], 0
      %s737 = sshll.u32 [#allocation11], 4
      %s738 = int_to_ptr.vmem [resolvable:$true] %s737
      %s739 = sshll.u32 %s5, 4
      %s740 = int_to_ptr.hbm [resolvable:$true] %s739
      %745 = dma.vmem_to_hbm [thread:$0]  %s738, 384, %s740, [#allocation4], 128, 128, 8
    $region45: #{tpu_custom_call.1} parent=1 // pred_fallthru
      _
    // Predicated region
    $region46: #{tpu_custom_call.1} parent=1 // pred_check
      _
    $region47: #{tpu_custom_call.1} parent=1 // pred_check_branch
      %747 = sbr.rel (0) target = $region49
    $region48: #{tpu_custom_call.1} parent=1 // pred_region
      %749 = dma.done [#allocation4], 384
    $region49: #{tpu_custom_call.1} parent=1 // pred_fallthru
      _
    %750 = vsyncpa [#allocation3], 1
    %751 = vsyncpa [#allocation6], 1
    %752 = vsyncpa [#allocation9], 1
    %753 = vsyncpa [#allocation4], 1

</llo_original>
